<compile_context>
chip_gen: v7x
topology: tpu7x:2x2x1
jax: 0.10.0
libtpu: 0.0.40
codegen_flags: <defaults>
</compile_context>

<pallas_src>
import functools

import jax
import jax.numpy as jnp
from jax.experimental import pallas as pl
from jax.experimental.pallas import tpu as pltpu

LANE = 128   # TPU vreg lane width
TQ_MAX = 256  # query-axis tile (rows) once episodes are long enough to tile


def _round_up(x, m):
    return ((x + m - 1) // m) * m


# ----------------------------------------------------------------------------
# Pallas kernel: soft attention for a block of timesteps + fused linear + tanh
# ----------------------------------------------------------------------------
def actor_episode_kernel(tok_q_ref, tok_kv_ref, tok_kT_ref, projs_ref, w_ref,
                         b_ref, out_ref):
    # tok_q_ref  : (TQ, Dp)          query-side tokens for this grid block
    # tok_kv_ref : (T_ENV, Dp)       all env tokens (values)
    # tok_kT_ref : (Dp, T_ENV)       pre-transposed env tokens (keys)
    # projs_ref  : (Dp, N_ATT*Dp)    batched per-head query projections
    # w_ref      : (N_ATT*Dp, DIMp)  concatenated-context projection weight
    # b_ref      : (1, DIMp)         bias
    # out_ref    : (TQ, DIMp)        per-timestep features (lane-dense store)
    d_p = tok_q_ref.shape[1]
    n_att = projs_ref.shape[1] // d_p

    tok_q = tok_q_ref[...]                                # (TQ, Dp)
    tok_kv = tok_kv_ref[...]                              # (T, Dp)
    tok_kT = tok_kT_ref[...]                              # (Dp, T)

    # Queries for ALL heads in one wide-N MXU matmul.
    q_all = jnp.dot(tok_q, projs_ref[...],
                    preferred_element_type=jnp.float32)   # (TQ, n_att*Dp)

    ctxs = []
    for h in range(n_att):                                # tiny, static unroll
        q_h = q_all[:, h * d_p:(h + 1) * d_p]             # (TQ, Dp) static slice
        s = jnp.dot(q_h, tok_kT,
                    preferred_element_type=jnp.float32)   # (TQ, T)
        s = s - jnp.max(s, axis=-1, keepdims=True)
        p = jnp.exp(s)
        p = p / jnp.sum(p, axis=-1, keepdims=True)        # exact softmax
        ctxs.append(jnp.dot(p, tok_kv,
                            preferred_element_type=jnp.float32))  # (TQ, Dp)

    # One wide-K matmul over the concatenated contexts.
    ctx_all = jnp.concatenate(ctxs, axis=-1)              # (TQ, n_att*Dp)
    out = jnp.dot(ctx_all, w_ref[...],
                  preferred_element_type=jnp.float32) + b_ref[...]
    out_ref[...] = jnp.tanh(out)


@functools.partial(jax.jit, static_argnames=("dim",))
def actor_episode_features(tokens, projs_2d_p, w_p, b_p, *, dim):
    """Features for EVERY timestep of the episode with one pallas_call.

    tokens:     (T_ENV, D_IN) f32  (per-episode, padded here)
    projs_2d_p: (Dp, N_ATT*Dp) f32 (pre-padded, episode-invariant)
    w_p:        (N_ATT*Dp, DIMp) f32
    b_p:        (1, DIMp) f32
    Returns (T_ENV, dim) f32.
    """
    t_env, d_in = tokens.shape
    d_p = projs_2d_p.shape[0]
    n_att_dp = projs_2d_p.shape[1]
    dim_p = w_p.shape[1]
    n_att = n_att_dp // d_p

    # Per-episode padding: feature dim -> 128 lanes (zero columns are inert in
    # softmax and matmuls; padded output columns are sliced off below).
    tokens_p = jnp.pad(tokens.astype(jnp.float32), ((0, 0), (0, d_p - d_in)))
    tokens_kT = tokens_p.T                                # (Dp, T) hoisted once

    # Query-axis tiling (parallel grid). Padded query ROWS only produce extra
    # output rows (sliced off); keys/values stay the T real tokens.
    tq = TQ_MAX if t_env >= TQ_MAX else t_env
    t_pad = _round_up(t_env, tq)
    tokens_q = jnp.pad(tokens_p, ((0, t_pad - t_env), (0, 0)))
    grid = (t_pad // tq,)

    # VMEM budget derived from the padded shapes (x2 for double buffering of
    # pipelined operands + transient q/score/ctx intermediates), clamped to
    # v7x's 64 MiB physical VMEM.
    f = 4
    io_bytes = 2 * f * (tq * d_p + t_env * d_p + d_p * t_env
                        + d_p * n_att_dp + n_att_dp * dim_p + dim_p
                        + tq * dim_p)
    tmp_bytes = f * (2 * tq * n_att_dp + 2 * tq * t_env)
    vmem_bytes = int(min(max(io_bytes + tmp_bytes + (4 << 20), 16 << 20),
                         64 << 20))

    cost = pl.CostEstimate(
        flops=int(2 * t_pad * d_p * n_att_dp                 # query proj
                  + n_att * 4 * t_pad * t_env * d_p          # scores + ctx
                  + 2 * t_pad * n_att_dp * dim_p),           # output proj
        transcendentals=int(n_att * t_pad * t_env + t_pad * dim_p),
        bytes_accessed=int(f * (t_pad * d_p + 2 * t_env * d_p + d_p * n_att_dp
                                + n_att_dp * dim_p + dim_p + t_pad * dim_p)),
    )

    out_p = pl.pallas_call(
        actor_episode_kernel,
        out_shape=jax.ShapeDtypeStruct((t_pad, dim_p), jnp.float32),
        grid=grid,
        in_specs=[
            pl.BlockSpec((tq, d_p), lambda i: (i, 0)),        # queries (tiled)
            pl.BlockSpec((t_env, d_p), lambda i: (0, 0)),     # values (full)
            pl.BlockSpec((d_p, t_env), lambda i: (0, 0)),     # keys^T (full)
            pl.BlockSpec((d_p, n_att_dp), lambda i: (0, 0)),  # batched projs
            pl.BlockSpec((n_att_dp, dim_p), lambda i: (0, 0)),
            pl.BlockSpec((1, dim_p), lambda i: (0, 0)),
        ],
        out_specs=pl.BlockSpec((tq, dim_p), lambda i: (i, 0)),
        compiler_params=pltpu.CompilerParams(
            dimension_semantics=("parallel",),
            vmem_limit_bytes=vmem_bytes),
        cost_estimate=cost,
    )(tokens_q, tokens_p, tokens_kT, projs_2d_p, w_p, b_p)
    return out_p[:t_env, :dim]
    # TODO(synk): for very long contexts (T >= ~4K) tile the key axis
    # flash-attention style (online softmax with m/l/acc scratch, key axis
    # last and "arbitrary") so the (TQ, T) score block never approaches the
    # VMEM budget; also consider bf16 operands once MXU/bandwidth bound.


# ----------------------------------------------------------------------------
# Python glue mirroring the PyTorch module structure
# ----------------------------------------------------------------------------
class TypeMemory:
    """Mirror of macarico TypeMemory: a single zero parameter (unused in fwd)."""

    def __init__(self):
        self.param = jnp.zeros((1,), jnp.float32)


class Env:
    """Tiny stand-in environment: a token sequence with a horizon/timestep."""

    def __init__(self, tokens):
        self.tokens = tokens
        self._t = 0

    def horizon(self):
        return self.tokens.shape[0]

    def timestep(self):
        return self._t


class DotAttention:
    """Attention module: emits a query vector for the current timestep.

    The per-timestep glue matmul is folded into the batched episode kernel
    (Actor uses `self.proj` directly); __call__ is kept for API parity.
    """

    actor_dependent = False

    def __init__(self, proj):
        self.proj = proj  # (D_IN, D_IN)

    def __call__(self, env):
        t = env.timestep()
        q = env.tokens[t][None, :] @ self.proj  # (1, D_IN)
        return [q]


class Actor:
    """JAX/Pallas port of macarico Actor with a concrete `_forward`."""

    OVERRIDE_FORWARD = True  # concrete _forward provided below

    def __init__(self, n_actions, dim, attention, w, b):
        self._current_env = None
        self._features = None
        self.n_actions = n_actions
        self.dim = dim
        self.attention = list(attention)
        self._T = None
        self._last_t = 0
        for att in attention:
            if att.actor_dependent:
                att.set_actor(self)
        self._typememory = TypeMemory()
        self._episode_features = None  # (T, dim) precomputed in one kernel

        # Episode-invariant weights are padded/stacked ONCE here (not per call).
        n_att = len(attention)
        d_in = attention[0].proj.shape[0]
        d_p = _round_up(d_in, LANE)
        dim_p = _round_up(dim, LANE)
        projs = jnp.stack([att.proj for att in attention], axis=0)  # (n,D,D)
        projs_pad = (jnp.zeros((n_att, d_p, d_p), jnp.float32)
                     .at[:, :d_in, :d_in].set(projs))
        # column blocks per head: (Dp, n_att*Dp)
        self._projs_2d_p = jnp.transpose(projs_pad, (1, 0, 2)).reshape(
            d_p, n_att * d_p)
        self._w_p = (jnp.zeros((n_att, d_p, dim_p), jnp.float32)
                     .at[:, :d_in, :dim].set(w.reshape(n_att, d_in, dim))
                     .reshape(n_att * d_p, dim_p))
        self._b_p = jnp.zeros((1, dim_p), jnp.float32).at[:, :dim].set(
            b.reshape(1, dim))

    def reset(self):
        self._last_t = 0
        self._T = None
        self._features = None
        self._episode_features = None

    def _forward_episode(self, env):
        # Batched equivalent of per-timestep `_forward`; valid because the
        # attention modules are not actor_dependent and env.tokens are static
        # for the episode.
        return actor_episode_features(env.tokens, self._projs_2d_p,
                                      self._w_p, self._b_p, dim=self.dim)

    def _forward(self, env, x):
        # Per-timestep view of the precomputed batch (kept for API parity).
        t = env.timestep()
        return self._episode_features[t][None, :]

    def forward(self, env):
        if self._features is None or self._T is None:
            self._T = env.horizon()
            self._features = [None] * self._T
            self._last_t = 0
            # One jitted pallas_call for the whole episode (perf: removes
            # per-timestep dispatch + pallas launch overhead).
            self._episode_features = self._forward_episode(env)
        t = env.timestep()
        assert t <= self._last_t + 1, '%d <= %d+1' % (t, self._last_t)
        assert t >= self._last_t, '%d >= %d' % (t, self._last_t)
        self._last_t = t
        assert self._features is not None
        assert t >= 0
        assert t < self._T
        assert t < len(self._features)
        if self._features[t] is not None:
            return self._features[t]
        assert t == 0 or self._features[t - 1] is not None
        ft = self._episode_features[t][None, :]  # (1, dim)
        assert ft.ndim == 2
        assert ft.shape[0] == 1
        assert ft.shape[1] == self.dim
        self._features[t] = ft
        return self._features[t]

    __call__ = forward


if __name__ == "__main__":
    # Small, forward-consistent shapes.
    T_ENV = 8      # env horizon / number of tokens
    D_IN = 32      # per-token feature width
    N_ATT = 2      # number of attention modules
    DIM = 32       # Actor output feature dim
    N_ACTIONS = 4

    key = jax.random.PRNGKey(0)
    k_tok, k_p0, k_p1, k_w, k_b = jax.random.split(key, 5)

    tokens = jax.random.normal(k_tok, (T_ENV, D_IN), jnp.float32)
    proj0 = jax.random.normal(k_p0, (D_IN, D_IN), jnp.float32) * 0.1
    proj1 = jax.random.normal(k_p1, (D_IN, D_IN), jnp.float32) * 0.1
    w = jax.random.normal(k_w, (N_ATT * D_IN, DIM), jnp.float32) * 0.1
    b = jax.random.normal(k_b, (1, DIM), jnp.float32) * 0.1

    env = Env(tokens)
    actor = Actor(N_ACTIONS, DIM,
                  [DotAttention(proj0), DotAttention(proj1)], w, b)

    # Drive the actor through the episode like a policy would.
    out = None
    for t in range(env.horizon()):
        env._t = t
        out = actor(env)

    out = jax.block_until_ready(out)
    assert out.shape == (1, DIM)
    assert jnp.all(jnp.isfinite(out))

    # Cross-check against a pure-JAX reference of the same forward pass.
    def ref_episode(tokens, projs, w, b):
        ctxs = []
        for h in range(projs.shape[0]):
            q = tokens @ projs[h]                    # (T, D_IN)
            s = q @ tokens.T                         # (T, T)
            p = jax.nn.softmax(s, axis=-1)
            ctxs.append(p @ tokens)                  # (T, D_IN)
        return jnp.tanh(jnp.concatenate(ctxs, axis=-1) @ w + b)

    projs = jnp.stack([proj0, proj1], axis=0)
    want = ref_episode(tokens, projs, w, b)
    got = jnp.concatenate([actor._features[t] for t in range(T_ENV)], axis=0)
    err = float(jnp.max(jnp.abs(got - want)))
    assert err < 1e-4, err  # exact softmax reciprocal -> f32 roundoff only

    print("KERNEL_OK")
</pallas_src>

<mosaic_0001>
module attributes {stable_mosaic.version = 11 : i64} {
  func.func @actor_episode_kernel(%arg0: i32, %arg1: memref<8x128xf32, #tpu.memory_space<vmem>>, %arg2: memref<8x128xf32, #tpu.memory_space<vmem>>, %arg3: memref<128x8xf32, #tpu.memory_space<vmem>>, %arg4: memref<128x256xf32, #tpu.memory_space<vmem>>, %arg5: memref<256x128xf32, #tpu.memory_space<vmem>>, %arg6: memref<1x128xf32, #tpu.memory_space<vmem>>, %arg7: memref<8x128xf32, #tpu.memory_space<vmem>>) attributes {dimension_semantics = [#tpu.dimension_semantics<parallel>], iteration_bounds = array<i64: 1>, scalar_prefetch = 0 : i64, scratch_operands = 0 : i64, tpu.core_type = #tpu.core_type<tc>, window_params = [{transform_indices = @transform_0, window_bounds = array<i64: 8, 128>}, {pipeline_mode = #tpu.pipeline_mode<synchronous>, transform_indices = @transform_1, window_bounds = array<i64: 8, 128>}, {pipeline_mode = #tpu.pipeline_mode<synchronous>, transform_indices = @transform_2, window_bounds = array<i64: 128, 8>}, {pipeline_mode = #tpu.pipeline_mode<synchronous>, transform_indices = @transform_3, window_bounds = array<i64: 128, 256>}, {pipeline_mode = #tpu.pipeline_mode<synchronous>, transform_indices = @transform_4, window_bounds = array<i64: 256, 128>}, {pipeline_mode = #tpu.pipeline_mode<synchronous>, transform_indices = @transform_5, window_bounds = array<i64: 1, 128>}, {transform_indices = @transform_6, window_bounds = array<i64: 8, 128>}]} {
    %c0 = arith.constant 0 : index
    %c0_0 = arith.constant 0 : index
    %0 = vector.load %arg1[%c0, %c0_0] : memref<8x128xf32, #tpu.memory_space<vmem>>, vector<8x128xf32>
    %c0_1 = arith.constant 0 : index
    %c0_2 = arith.constant 0 : index
    %1 = vector.load %arg2[%c0_1, %c0_2] : memref<8x128xf32, #tpu.memory_space<vmem>>, vector<8x128xf32>
    %c0_3 = arith.constant 0 : index
    %c0_4 = arith.constant 0 : index
    %2 = vector.load %arg3[%c0_3, %c0_4] : memref<128x8xf32, #tpu.memory_space<vmem>>, vector<128x8xf32>
    %c0_5 = arith.constant 0 : index
    %c0_6 = arith.constant 0 : index
    %3 = vector.load %arg4[%c0_5, %c0_6] : memref<128x256xf32, #tpu.memory_space<vmem>>, vector<128x256xf32>
    %cst = arith.constant dense<0.000000e+00> : vector<8x256xf32>
    %4 = tpu.matmul %0, %3, %cst {dimension_numbers = #tpu.dot_dimension_numbers<[1], [0], [0], [1], [0, 0, 1, 1], [], []>} : vector<8x128xf32>, vector<128x256xf32>, vector<8x256xf32> -> vector<8x256xf32>
    %5 = vector.extract_strided_slice %4 {offsets = [0, 0], sizes = [8, 128], strides = [1, 1]} : vector<8x256xf32> to vector<8x128xf32>
    %cst_7 = arith.constant dense<0.000000e+00> : vector<8x8xf32>
    %6 = tpu.matmul %5, %2, %cst_7 {dimension_numbers = #tpu.dot_dimension_numbers<[1], [0], [0], [1], [0, 0, 1, 1], [], []>} : vector<8x128xf32>, vector<128x8xf32>, vector<8x8xf32> -> vector<8x8xf32>
    %cst_8 = arith.constant dense<0xFF800000> : vector<8xf32>
    %7 = vector.multi_reduction <maximumf>, %6, %cst_8 [1] : vector<8x8xf32> to vector<8xf32>
    %8 = vector.shape_cast %7 : vector<8xf32> to vector<8x1xf32>
    %9 = vector.broadcast %8 : vector<8x1xf32> to vector<8x8xf32>
    %10 = arith.subf %6, %9 : vector<8x8xf32>
    %11 = math.exp %10 : vector<8x8xf32>
    %cst_9 = arith.constant dense<0.000000e+00> : vector<8xf32>
    %12 = vector.multi_reduction <add>, %11, %cst_9 [1] : vector<8x8xf32> to vector<8xf32>
    %13 = vector.shape_cast %12 : vector<8xf32> to vector<8x1xf32>
    %14 = vector.broadcast %13 : vector<8x1xf32> to vector<8x8xf32>
    %15 = arith.divf %11, %14 : vector<8x8xf32>
    %cst_10 = arith.constant dense<0.000000e+00> : vector<8x128xf32>
    %16 = tpu.matmul %15, %1, %cst_10 {dimension_numbers = #tpu.dot_dimension_numbers<[1], [0], [0], [1], [0, 0, 1, 1], [], []>} : vector<8x8xf32>, vector<8x128xf32>, vector<8x128xf32> -> vector<8x128xf32>
    %17 = vector.extract_strided_slice %4 {offsets = [0, 128], sizes = [8, 128], strides = [1, 1]} : vector<8x256xf32> to vector<8x128xf32>
    %cst_11 = arith.constant dense<0.000000e+00> : vector<8x8xf32>
    %18 = tpu.matmul %17, %2, %cst_11 {dimension_numbers = #tpu.dot_dimension_numbers<[1], [0], [0], [1], [0, 0, 1, 1], [], []>} : vector<8x128xf32>, vector<128x8xf32>, vector<8x8xf32> -> vector<8x8xf32>
    %cst_12 = arith.constant dense<0xFF800000> : vector<8xf32>
    %19 = vector.multi_reduction <maximumf>, %18, %cst_12 [1] : vector<8x8xf32> to vector<8xf32>
    %20 = vector.shape_cast %19 : vector<8xf32> to vector<8x1xf32>
    %21 = vector.broadcast %20 : vector<8x1xf32> to vector<8x8xf32>
    %22 = arith.subf %18, %21 : vector<8x8xf32>
    %23 = math.exp %22 : vector<8x8xf32>
    %cst_13 = arith.constant dense<0.000000e+00> : vector<8xf32>
    %24 = vector.multi_reduction <add>, %23, %cst_13 [1] : vector<8x8xf32> to vector<8xf32>
    %25 = vector.shape_cast %24 : vector<8xf32> to vector<8x1xf32>
    %26 = vector.broadcast %25 : vector<8x1xf32> to vector<8x8xf32>
    %27 = arith.divf %23, %26 : vector<8x8xf32>
    %cst_14 = arith.constant dense<0.000000e+00> : vector<8x128xf32>
    %28 = tpu.matmul %27, %1, %cst_14 {dimension_numbers = #tpu.dot_dimension_numbers<[1], [0], [0], [1], [0, 0, 1, 1], [], []>} : vector<8x8xf32>, vector<8x128xf32>, vector<8x128xf32> -> vector<8x128xf32>
    %29 = tpu.concatenate %16, %28 in 1 : vector<8x128xf32>, vector<8x128xf32> -> vector<8x256xf32>
    %c0_15 = arith.constant 0 : index
    %c0_16 = arith.constant 0 : index
    %30 = vector.load %arg5[%c0_15, %c0_16] : memref<256x128xf32, #tpu.memory_space<vmem>>, vector<256x128xf32>
    %cst_17 = arith.constant dense<0.000000e+00> : vector<8x128xf32>
    %31 = tpu.matmul %29, %30, %cst_17 {dimension_numbers = #tpu.dot_dimension_numbers<[1], [0], [0], [1], [0, 0, 1, 1], [], []>} : vector<8x256xf32>, vector<256x128xf32>, vector<8x128xf32> -> vector<8x128xf32>
    %c0_18 = arith.constant 0 : index
    %c0_19 = arith.constant 0 : index
    %32 = vector.load %arg6[%c0_18, %c0_19] : memref<1x128xf32, #tpu.memory_space<vmem>>, vector<1x128xf32>
    %33 = vector.broadcast %32 : vector<1x128xf32> to vector<8x128xf32>
    %34 = arith.addf %31, %33 : vector<8x128xf32>
    %35 = math.tanh %34 : vector<8x128xf32>
    %c0_20 = arith.constant 0 : index
    %c0_21 = arith.constant 0 : index
    %36 = vector.load %arg7[%c0_20, %c0_21] : memref<8x128xf32, #tpu.memory_space<vmem>>, vector<8x128xf32>
    tpu.vector_store %arg7[%c0_20, %c0_21], %35 {strides = array<i32>} : memref<8x128xf32, #tpu.memory_space<vmem>>, vector<8x128xf32>,
    return
  }
  func.func @transform_0(%arg0: i32) -> (i32, i32) {
    %c0_i32 = arith.constant 0 : i32
    %c0_i32_0 = arith.constant 0 : i32
    return %arg0, %c0_i32 : i32, i32
  }
  func.func @transform_1(%arg0: i32) -> (i32, i32) {
    %c0_i32 = arith.constant 0 : i32
    %c0_i32_0 = arith.constant 0 : i32
    %c0_i32_1 = arith.constant 0 : i32
    return %c0_i32, %c0_i32_0 : i32, i32
  }
  func.func @transform_2(%arg0: i32) -> (i32, i32) {
    %c0_i32 = arith.constant 0 : i32
    %c0_i32_0 = arith.constant 0 : i32
    %c0_i32_1 = arith.constant 0 : i32
    return %c0_i32, %c0_i32_0 : i32, i32
  }
  func.func @transform_3(%arg0: i32) -> (i32, i32) {
    %c0_i32 = arith.constant 0 : i32
    %c0_i32_0 = arith.constant 0 : i32
    %c0_i32_1 = arith.constant 0 : i32
    return %c0_i32, %c0_i32_0 : i32, i32
  }
  func.func @transform_4(%arg0: i32) -> (i32, i32) {
    %c0_i32 = arith.constant 0 : i32
    %c0_i32_0 = arith.constant 0 : i32
    %c0_i32_1 = arith.constant 0 : i32
    return %c0_i32, %c0_i32_0 : i32, i32
  }
  func.func @transform_5(%arg0: i32) -> (i32, i32) {
    %c0_i32 = arith.constant 0 : i32
    %c0_i32_0 = arith.constant 0 : i32
    %c0_i32_1 = arith.constant 0 : i32
    return %c0_i32, %c0_i32_0 : i32, i32
  }
  func.func @transform_6(%arg0: i32) -> (i32, i32) {
    %c0_i32 = arith.constant 0 : i32
    %c0_i32_0 = arith.constant 0 : i32
    return %arg0, %c0_i32 : i32, i32
  }
}

</mosaic_0001>

<llo_original>
// kernel: actor_episode_features.1
$region0: #{actor_episode_features.1}
  #allocation0 [shape = 'u32[]', space=smem, size = 0x4, offset = 0x4, fixed_abs, tag = 'smem constant byte address 0x4 - core index']
  #allocation1 [shape = 'u32[144,128]{1,0:T(1,128)}', space=vmem, size = 0x12000, scoped, tag = 'internal scratch']
  %s0 = inlined_call_operand.vmem [shape: f32[8,128], index: 0, kind: input, shape index: {}, may-alias: {0,1}]
  %s1 = inlined_call_operand.vmem [shape: f32[8,128], index: 1, kind: input, shape index: {}, may-alias: {0,1}]
  %s2 = inlined_call_operand.vmem [shape: f32[128,8], index: 2, kind: input, shape index: {}]
  %s3 = inlined_call_operand.vmem [shape: f32[128,256], index: 3, kind: input, shape index: {}]
  %s4 = inlined_call_operand.hbm [shape: f32[256,128], index: 4, kind: input, shape index: {}]
  %s5 = inlined_call_operand.vmem [shape: f32[1,128], index: 5, kind: input, shape index: {}]
  %s6 = inlined_call_operand.hbm [shape: f32[8,128], index: 6, kind: output, shape index: {}]
  %s7 = sld [smem:[#allocation0]]
  $region38: #{actor_episode_features.1} parent=0
    _
  %s9 = ssub.s32 1, %s7
  %s10 = scalar_select 0, %s9, %s7
  $region1: #{actor_episode_features.1} parent=0
    #allocation2 [shape = 'u8[131072]{0}', space=vmem, size = 0x20000, scoped, tag = 'input window, operand 4, single buffered']
    #allocation3 [shape = 's32[1]{0}', space=sflag, size = 0x4, scoped, tag = 'scoped memory for actor_episode_features.1']
    #allocation4 [shape = 's32[1]{0}', space=sflag, size = 0x4, scoped, tag = 'scoped memory for actor_episode_features.1']
    #allocation5 [shape = 'u8[4096]{0}', space=vmem, size = 0x1000, scoped, tag = 'output window, operand 0, single buffered']
    %11 = vsyncpa [#allocation3], 0
    %12 = vsyncpa [#allocation4], 0
    // Predicated region
    $region2: #{actor_episode_features.1} parent=1 // pred_check
      _
    $region3: #{actor_episode_features.1} parent=1 // pred_check_branch
      %14 = sbr.rel (0) target = $region5
    $region4: #{actor_episode_features.1} parent=1 // pred_region
      _
    $region5: #{actor_episode_features.1} parent=1 // pred_fallthru
      _
    // Predicated region
    $region6: #{actor_episode_features.1} parent=1 // pred_check
      _
    $region7: #{actor_episode_features.1} parent=1 // pred_check_branch
      %16 = sbr.rel (0) target = $region9
    $region8: #{actor_episode_features.1} parent=1 // pred_region
      _
    $region9: #{actor_episode_features.1} parent=1 // pred_fallthru
      _
    // Predicated region
    $region10: #{actor_episode_features.1} parent=1 // pred_check
      _
    $region11: #{actor_episode_features.1} parent=1 // pred_check_branch
      %18 = sbr.rel (0) target = $region13
    $region12: #{actor_episode_features.1} parent=1 // pred_region
      _
    $region13: #{actor_episode_features.1} parent=1 // pred_fallthru
      _
    // Predicated region
    $region14: #{actor_episode_features.1} parent=1 // pred_check
      _
    $region15: #{actor_episode_features.1} parent=1 // pred_check_branch
      %20 = sbr.rel (0) target = $region17
    $region16: #{actor_episode_features.1} parent=1 // pred_region
      _
    $region17: #{actor_episode_features.1} parent=1 // pred_fallthru
      _
    // Predicated region
    $region18: #{actor_episode_features.1} parent=1 // pred_check
      _
    $region19: #{actor_episode_features.1} parent=1 // pred_check_branch
      %22 = sbr.rel (0) target = $region21
    $region20: #{actor_episode_features.1} parent=1 // pred_region
      %s24 = ssub.s32 4096, 4096
      %25 = vsyncadd [#allocation3], %s24
      %s26 = sshll.u32 [#allocation2], 4
      %s27 = int_to_ptr.vmem [resolvable:$true] %s26
      %32 = dma.hbm_to_vmem [thread:$0]  %s4, 4096, %s27, [#allocation3], 128, 128, 8
    $region21: #{actor_episode_features.1} parent=1 // pred_fallthru
      _
    // Predicated region
    $region22: #{actor_episode_features.1} parent=1 // pred_check
      _
    $region23: #{actor_episode_features.1} parent=1 // pred_check_branch
      %34 = sbr.rel (0) target = $region25
    $region24: #{actor_episode_features.1} parent=1 // pred_region
      _
    $region25: #{actor_episode_features.1} parent=1 // pred_fallthru
      _
    // Predicated region
    $region26: #{actor_episode_features.1} parent=1 // pred_check
      _
    $region27: #{actor_episode_features.1} parent=1 // pred_check_branch
      %36 = sbr.rel (0) target = $region29
    $region28: #{actor_episode_features.1} parent=1 // pred_region
      %37 = dma.done [#allocation3], 4096
    $region29: #{actor_episode_features.1} parent=1 // pred_fallthru
      _
    %v38 = vld [vmem:[%s0] sm:$0xff]
    %v39 = vld [vmem:[%s1] sm:$0xff]
    %v40 = vld [vmem:[%s2] sm:$0xff]
    %v41 = vld [vmem:[%s2 + $0x8] sm:$0xff]
    %v42 = vld [vmem:[%s2 + $0x10] sm:$0xff]
    %v43 = vld [vmem:[%s2 + $0x18] sm:$0xff]
    %v44 = vld [vmem:[%s2 + $0x20] sm:$0xff]
    %v45 = vld [vmem:[%s2 + $0x28] sm:$0xff]
    %v46 = vld [vmem:[%s2 + $0x30] sm:$0xff]
    %v47 = vld [vmem:[%s2 + $0x38] sm:$0xff]
    %v48 = vld [vmem:[%s2 + $0x40] sm:$0xff]
    %v49 = vld [vmem:[%s2 + $0x48] sm:$0xff]
    %v50 = vld [vmem:[%s2 + $0x50] sm:$0xff]
    %v51 = vld [vmem:[%s2 + $0x58] sm:$0xff]
    %v52 = vld [vmem:[%s2 + $0x60] sm:$0xff]
    %v53 = vld [vmem:[%s2 + $0x68] sm:$0xff]
    %v54 = vld [vmem:[%s2 + $0x70] sm:$0xff]
    %v55 = vld [vmem:[%s2 + $0x78] sm:$0xff]
    %v56 = vld [vmem:[%s3] sm:$0xff]
    %v57 = vld [vmem:[%s3 + $0x8] sm:$0xff]
    %v58 = vld [vmem:[%s3 + $0x10] sm:$0xff]
    %v59 = vld [vmem:[%s3 + $0x18] sm:$0xff]
    %v60 = vld [vmem:[%s3 + $0x20] sm:$0xff]
    %v61 = vld [vmem:[%s3 + $0x28] sm:$0xff]
    %v62 = vld [vmem:[%s3 + $0x30] sm:$0xff]
    %v63 = vld [vmem:[%s3 + $0x38] sm:$0xff]
    %v64 = vld [vmem:[%s3 + $0x40] sm:$0xff]
    %v65 = vld [vmem:[%s3 + $0x48] sm:$0xff]
    %v66 = vld [vmem:[%s3 + $0x50] sm:$0xff]
    %v67 = vld [vmem:[%s3 + $0x58] sm:$0xff]
    %v68 = vld [vmem:[%s3 + $0x60] sm:$0xff]
    %v69 = vld [vmem:[%s3 + $0x68] sm:$0xff]
    %v70 = vld [vmem:[%s3 + $0x70] sm:$0xff]
    %v71 = vld [vmem:[%s3 + $0x78] sm:$0xff]
    %v72 = vld [vmem:[%s3 + $0x80] sm:$0xff]
    %v73 = vld [vmem:[%s3 + $0x88] sm:$0xff]
    %v74 = vld [vmem:[%s3 + $0x90] sm:$0xff]
    %v75 = vld [vmem:[%s3 + $0x98] sm:$0xff]
    %v76 = vld [vmem:[%s3 + $0xa0] sm:$0xff]
    %v77 = vld [vmem:[%s3 + $0xa8] sm:$0xff]
    %v78 = vld [vmem:[%s3 + $0xb0] sm:$0xff]
    %v79 = vld [vmem:[%s3 + $0xb8] sm:$0xff]
    %v80 = vld [vmem:[%s3 + $0xc0] sm:$0xff]
    %v81 = vld [vmem:[%s3 + $0xc8] sm:$0xff]
    %v82 = vld [vmem:[%s3 + $0xd0] sm:$0xff]
    %v83 = vld [vmem:[%s3 + $0xd8] sm:$0xff]
    %v84 = vld [vmem:[%s3 + $0xe0] sm:$0xff]
    %v85 = vld [vmem:[%s3 + $0xe8] sm:$0xff]
    %v86 = vld [vmem:[%s3 + $0xf0] sm:$0xff]
    %v87 = vld [vmem:[%s3 + $0xf8] sm:$0xff]
    %88 = vmatprep.subr.mxu0 %v57
    %89 = vmatpush1.msra.mxu0 %v56
    %90 = vmatprep.subr.mxu0 %v59
    %91 = vmatpush1.msra.mxu0 %v58
    %92 = vmatprep.subr.mxu0 %v61
    %93 = vmatpush1.msra.mxu0 %v60
    %94 = vmatprep.subr.mxu0 %v63
    %95 = vmatpush1.msra.mxu0 %v62
    %96 = vmatprep.subr.mxu0 %v65
    %97 = vmatpush1.msra.mxu0 %v64
    %98 = vmatprep.subr.mxu0 %v67
    %99 = vmatpush1.msra.mxu0 %v66
    %100 = vmatprep.subr.mxu0 %v69
    %101 = vmatpush1.msra.mxu0 %v68
    %102 = vmatprep.subr.mxu0 %v71
    %103 = vmatpush1.msra.mxu0 %v70
    %104 = vmatprep.subr.mxu0 %v73
    %105 = vmatpush1.msra.mxu0 %v72
    %106 = vmatprep.subr.mxu0 %v75
    %107 = vmatpush1.msra.mxu0 %v74
    %108 = vmatprep.subr.mxu0 %v77
    %109 = vmatpush1.msra.mxu0 %v76
    %110 = vmatprep.subr.mxu0 %v79
    %111 = vmatpush1.msra.mxu0 %v78
    %112 = vmatprep.subr.mxu0 %v81
    %113 = vmatpush1.msra.mxu0 %v80
    %114 = vmatprep.subr.mxu0 %v83
    %115 = vmatpush1.msra.mxu0 %v82
    %116 = vmatprep.subr.mxu0 %v85
    %117 = vmatpush1.msra.mxu0 %v84
    %118 = vmatprep.subr.mxu0 %v87
    %119 = vmatpush1.msra.mxu0 %v86
    %120 = vmatprep.subr.mxu0 0.0
    %121 = vmatpush1.msra.mxu0 0.0
    %122 = vmatprep.subr.mxu0 0.0
    %123 = vmatpush1.msra.mxu0 0.0
    %124 = vmatprep.subr.mxu0 0.0
    %125 = vmatpush1.msra.mxu0 0.0
    %126 = vmatprep.subr.mxu0 0.0
    %127 = vmatpush1.msra.mxu0 0.0
    %128 = vmatprep.subr.mxu0 0.0
    %129 = vmatpush1.msra.mxu0 0.0
    %130 = vmatprep.subr.mxu0 0.0
    %131 = vmatpush1.msra.mxu0 0.0
    %132 = vmatprep.subr.mxu0 0.0
    %133 = vmatpush1.msra.mxu0 0.0
    %134 = vmatprep.subr.mxu0 0.0
    %135 = vmatpush1.msra.mxu0 0.0
    %136 = vmatprep.subr.mxu0 0.0
    %137 = vmatpush1.msra.mxu0 0.0
    %138 = vmatprep.subr.mxu0 0.0
    %139 = vmatpush1.msra.mxu0 0.0
    %140 = vmatprep.subr.mxu0 0.0
    %141 = vmatpush1.msra.mxu0 0.0
    %142 = vmatprep.subr.mxu0 0.0
    %143 = vmatpush1.msra.mxu0 0.0
    %144 = vmatprep.subr.mxu0 0.0
    %145 = vmatpush1.msra.mxu0 0.0
    %146 = vmatprep.subr.mxu0 0.0
    %147 = vmatpush1.msra.mxu0 0.0
    %148 = vmatprep.subr.mxu0 0.0
    %149 = vmatpush1.msra.mxu0 0.0
    %150 = vmatprep.subr.mxu0 0.0
    %151 = vmatpush1.msra.mxu0 0.0
    %152 = vmatprep.mubr.f32.mxu0 0.0
    %153 = vmatmul.mubr.f32.gmra.mrb[0].mxu0 %v38
    %v154 = vpop.f32.mrb[0].mxu0
    %v155 = vadd.f32 0.0, %v154
    %v156 = vpop.f32.mrb[0].mxu0
    %v157 = vadd.f32 0.0, %v156
    %158 = vdwg.mxu0
    %159 = vmatprep.subr.mxu0 0.0
    %160 = vmatpush1.msra.mxu0 %v40
    %161 = vmatprep.subr.mxu0 0.0
    %162 = vmatpush1.msra.mxu0 %v41
    %163 = vmatprep.subr.mxu0 0.0
    %164 = vmatpush1.msra.mxu0 %v42
    %165 = vmatprep.subr.mxu0 0.0
    %166 = vmatpush1.msra.mxu0 %v43
    %167 = vmatprep.subr.mxu0 0.0
    %168 = vmatpush1.msra.mxu0 %v44
    %169 = vmatprep.subr.mxu0 0.0
    %170 = vmatpush1.msra.mxu0 %v45
    %171 = vmatprep.subr.mxu0 0.0
    %172 = vmatpush1.msra.mxu0 %v46
    %173 = vmatprep.subr.mxu0 0.0
    %174 = vmatpush1.msra.mxu0 %v47
    %175 = vmatprep.subr.mxu0 0.0
    %176 = vmatpush1.msra.mxu0 %v48
    %177 = vmatprep.subr.mxu0 0.0
    %178 = vmatpush1.msra.mxu0 %v49
    %179 = vmatprep.subr.mxu0 0.0
    %180 = vmatpush1.msra.mxu0 %v50
    %181 = vmatprep.subr.mxu0 0.0
    %182 = vmatpush1.msra.mxu0 %v51
    %183 = vmatprep.subr.mxu0 0.0
    %184 = vmatpush1.msra.mxu0 %v52
    %185 = vmatprep.subr.mxu0 0.0
    %186 = vmatpush1.msra.mxu0 %v53
    %187 = vmatprep.subr.mxu0 0.0
    %188 = vmatpush1.msra.mxu0 %v54
    %189 = vmatprep.subr.mxu0 0.0
    %190 = vmatpush1.msra.mxu0 %v55
    %191 = vmatprep.subr.mxu0 0.0
    %192 = vmatpush1.msra.mxu0 0.0
    %193 = vmatprep.subr.mxu0 0.0
    %194 = vmatpush1.msra.mxu0 0.0
    %195 = vmatprep.subr.mxu0 0.0
    %196 = vmatpush1.msra.mxu0 0.0
    %197 = vmatprep.subr.mxu0 0.0
    %198 = vmatpush1.msra.mxu0 0.0
    %199 = vmatprep.subr.mxu0 0.0
    %200 = vmatpush1.msra.mxu0 0.0
    %201 = vmatprep.subr.mxu0 0.0
    %202 = vmatpush1.msra.mxu0 0.0
    %203 = vmatprep.subr.mxu0 0.0
    %204 = vmatpush1.msra.mxu0 0.0
    %205 = vmatprep.subr.mxu0 0.0
    %206 = vmatpush1.msra.mxu0 0.0
    %207 = vmatprep.subr.mxu0 0.0
    %208 = vmatpush1.msra.mxu0 0.0
    %209 = vmatprep.subr.mxu0 0.0
    %210 = vmatpush1.msra.mxu0 0.0
    %211 = vmatprep.subr.mxu0 0.0
    %212 = vmatpush1.msra.mxu0 0.0
    %213 = vmatprep.subr.mxu0 0.0
    %214 = vmatpush1.msra.mxu0 0.0
    %215 = vmatprep.subr.mxu0 0.0
    %216 = vmatpush1.msra.mxu0 0.0
    %217 = vmatprep.subr.mxu0 0.0
    %218 = vmatpush1.msra.mxu0 0.0
    %219 = vmatprep.subr.mxu0 0.0
    %220 = vmatpush1.msra.mxu0 0.0
    %221 = vmatprep.subr.mxu0 0.0
    %222 = vmatpush1.msra.mxu0 0.0
    %223 = vmatprep.mubr.f32.mxu0 0.0
    %224 = vmatmul.mubr.f32.gmra.mrb[0].mxu0 %v155
    %v225 = vpop.f32.mrb[0].mxu0
    %v226 = vadd.f32 0.0, %v225
    %v227 = vpop.f32.mrb[0].mxu0
    %228 = vdwg.mxu0
    %vm229 = vcmask 64512
    %v230 = vsel %vm229, %v226, -inf
    %231 = vmax.xlane.f32.xlu0 %v230
    %v232 = vpop.xlane.xlu0 %231
    %v233 = vsub.f32 %v226, %v232
    %v234 = vmul.f32 %v233, 1.442695
    %v235 = vpow.pop %v234
    %v236 = vsel %vm229, %v235, 0.0
    %237 = vadd.xlane.f32.xlu0 %v236
    %v238 = vpop.xlane.xlu0 %237
    %v239 = vrcp.pop %v238
    %v240 = vmul.f32 %v235, %v239
    %v242 = vsel %vm229, %v240, 0
    %244 = vmatprep.subr.mxu0 0.0
    %245 = vmatpush1.msra.mxu0 %v39
    %246 = vmatprep.subr.mxu0 0.0
    %247 = vmatpush1.msra.mxu0 0.0
    %248 = vmatprep.subr.mxu0 0.0
    %249 = vmatpush1.msra.mxu0 0.0
    %250 = vmatprep.subr.mxu0 0.0
    %251 = vmatpush1.msra.mxu0 0.0
    %252 = vmatprep.subr.mxu0 0.0
    %253 = vmatpush1.msra.mxu0 0.0
    %254 = vmatprep.subr.mxu0 0.0
    %255 = vmatpush1.msra.mxu0 0.0
    %256 = vmatprep.subr.mxu0 0.0
    %257 = vmatpush1.msra.mxu0 0.0
    %258 = vmatprep.subr.mxu0 0.0
    %259 = vmatpush1.msra.mxu0 0.0
    %260 = vmatprep.subr.mxu0 0.0
    %261 = vmatpush1.msra.mxu0 0.0
    %262 = vmatprep.subr.mxu0 0.0
    %263 = vmatpush1.msra.mxu0 0.0
    %264 = vmatprep.subr.mxu0 0.0
    %265 = vmatpush1.msra.mxu0 0.0
    %266 = vmatprep.subr.mxu0 0.0
    %267 = vmatpush1.msra.mxu0 0.0
    %268 = vmatprep.subr.mxu0 0.0
    %269 = vmatpush1.msra.mxu0 0.0
    %270 = vmatprep.subr.mxu0 0.0
    %271 = vmatpush1.msra.mxu0 0.0
    %272 = vmatprep.subr.mxu0 0.0
    %273 = vmatpush1.msra.mxu0 0.0
    %274 = vmatprep.subr.mxu0 0.0
    %275 = vmatpush1.msra.mxu0 0.0
    %276 = vmatprep.subr.mxu0 0.0
    %277 = vmatpush1.msra.mxu0 0.0
    %278 = vmatprep.subr.mxu0 0.0
    %279 = vmatpush1.msra.mxu0 0.0
    %280 = vmatprep.subr.mxu0 0.0
    %281 = vmatpush1.msra.mxu0 0.0
    %282 = vmatprep.subr.mxu0 0.0
    %283 = vmatpush1.msra.mxu0 0.0
    %284 = vmatprep.subr.mxu0 0.0
    %285 = vmatpush1.msra.mxu0 0.0
    %286 = vmatprep.subr.mxu0 0.0
    %287 = vmatpush1.msra.mxu0 0.0
    %288 = vmatprep.subr.mxu0 0.0
    %289 = vmatpush1.msra.mxu0 0.0
    %290 = vmatprep.subr.mxu0 0.0
    %291 = vmatpush1.msra.mxu0 0.0
    %292 = vmatprep.subr.mxu0 0.0
    %293 = vmatpush1.msra.mxu0 0.0
    %294 = vmatprep.subr.mxu0 0.0
    %295 = vmatpush1.msra.mxu0 0.0
    %296 = vmatprep.subr.mxu0 0.0
    %297 = vmatpush1.msra.mxu0 0.0
    %298 = vmatprep.subr.mxu0 0.0
    %299 = vmatpush1.msra.mxu0 0.0
    %300 = vmatprep.subr.mxu0 0.0
    %301 = vmatpush1.msra.mxu0 0.0
    %302 = vmatprep.subr.mxu0 0.0
    %303 = vmatpush1.msra.mxu0 0.0
    %304 = vmatprep.subr.mxu0 0.0
    %305 = vmatpush1.msra.mxu0 0.0
    %306 = vmatprep.subr.mxu0 0.0
    %307 = vmatpush1.msra.mxu0 0.0
    %308 = vmatprep.mubr.f32.mxu0 0.0
    %309 = vmatmul.mubr.f32.gmra.mrb[0].mxu0 %v242
    %v310 = vpop.f32.mrb[0].mxu0
    %v311 = vadd.f32 0.0, %v310
    %v312 = vpop.f32.mrb[0].mxu0
    %313 = vdwg.mxu0
    %314 = vmatprep.subr.mxu0 0.0
    %315 = vmatpush1.msra.mxu0 %v40
    %316 = vmatprep.subr.mxu0 0.0
    %317 = vmatpush1.msra.mxu0 %v41
    %318 = vmatprep.subr.mxu0 0.0
    %319 = vmatpush1.msra.mxu0 %v42
    %320 = vmatprep.subr.mxu0 0.0
    %321 = vmatpush1.msra.mxu0 %v43
    %322 = vmatprep.subr.mxu0 0.0
    %323 = vmatpush1.msra.mxu0 %v44
    %324 = vmatprep.subr.mxu0 0.0
    %325 = vmatpush1.msra.mxu0 %v45
    %326 = vmatprep.subr.mxu0 0.0
    %327 = vmatpush1.msra.mxu0 %v46
    %328 = vmatprep.subr.mxu0 0.0
    %329 = vmatpush1.msra.mxu0 %v47
    %330 = vmatprep.subr.mxu0 0.0
    %331 = vmatpush1.msra.mxu0 %v48
    %332 = vmatprep.subr.mxu0 0.0
    %333 = vmatpush1.msra.mxu0 %v49
    %334 = vmatprep.subr.mxu0 0.0
    %335 = vmatpush1.msra.mxu0 %v50
    %336 = vmatprep.subr.mxu0 0.0
    %337 = vmatpush1.msra.mxu0 %v51
    %338 = vmatprep.subr.mxu0 0.0
    %339 = vmatpush1.msra.mxu0 %v52
    %340 = vmatprep.subr.mxu0 0.0
    %341 = vmatpush1.msra.mxu0 %v53
    %342 = vmatprep.subr.mxu0 0.0
    %343 = vmatpush1.msra.mxu0 %v54
    %344 = vmatprep.subr.mxu0 0.0
    %345 = vmatpush1.msra.mxu0 %v55
    %346 = vmatprep.subr.mxu0 0.0
    %347 = vmatpush1.msra.mxu0 0.0
    %348 = vmatprep.subr.mxu0 0.0
    %349 = vmatpush1.msra.mxu0 0.0
    %350 = vmatprep.subr.mxu0 0.0
    %351 = vmatpush1.msra.mxu0 0.0
    %352 = vmatprep.subr.mxu0 0.0
    %353 = vmatpush1.msra.mxu0 0.0
    %354 = vmatprep.subr.mxu0 0.0
    %355 = vmatpush1.msra.mxu0 0.0
    %356 = vmatprep.subr.mxu0 0.0
    %357 = vmatpush1.msra.mxu0 0.0
    %358 = vmatprep.subr.mxu0 0.0
    %359 = vmatpush1.msra.mxu0 0.0
    %360 = vmatprep.subr.mxu0 0.0
    %361 = vmatpush1.msra.mxu0 0.0
    %362 = vmatprep.subr.mxu0 0.0
    %363 = vmatpush1.msra.mxu0 0.0
    %364 = vmatprep.subr.mxu0 0.0
    %365 = vmatpush1.msra.mxu0 0.0
    %366 = vmatprep.subr.mxu0 0.0
    %367 = vmatpush1.msra.mxu0 0.0
    %368 = vmatprep.subr.mxu0 0.0
    %369 = vmatpush1.msra.mxu0 0.0
    %370 = vmatprep.subr.mxu0 0.0
    %371 = vmatpush1.msra.mxu0 0.0
    %372 = vmatprep.subr.mxu0 0.0
    %373 = vmatpush1.msra.mxu0 0.0
    %374 = vmatprep.subr.mxu0 0.0
    %375 = vmatpush1.msra.mxu0 0.0
    %376 = vmatprep.subr.mxu0 0.0
    %377 = vmatpush1.msra.mxu0 0.0
    %378 = vmatprep.mubr.f32.mxu0 0.0
    %379 = vmatmul.mubr.f32.gmra.mrb[0].mxu0 %v157
    %v380 = vpop.f32.mrb[0].mxu0
    %v381 = vadd.f32 0.0, %v380
    %v382 = vpop.f32.mrb[0].mxu0
    %383 = vdwg.mxu0
    %v384 = vsel %vm229, %v381, -inf
    %385 = vmax.xlane.f32.xlu0 %v384
    %v386 = vpop.xlane.xlu0 %385
    %v387 = vsub.f32 %v381, %v386
    %v388 = vmul.f32 %v387, 1.442695
    %v389 = vpow.pop %v388
    %v390 = vsel %vm229, %v389, 0.0
    %391 = vadd.xlane.f32.xlu0 %v390
    %v392 = vpop.xlane.xlu0 %391
    %v393 = vrcp.pop %v392
    %v394 = vmul.f32 %v389, %v393
    %v396 = vsel %vm229, %v394, 0
    %398 = vmatprep.subr.mxu0 0.0
    %399 = vmatpush1.msra.mxu0 %v39
    %400 = vmatprep.subr.mxu0 0.0
    %401 = vmatpush1.msra.mxu0 0.0
    %402 = vmatprep.subr.mxu0 0.0
    %403 = vmatpush1.msra.mxu0 0.0
    %404 = vmatprep.subr.mxu0 0.0
    %405 = vmatpush1.msra.mxu0 0.0
    %406 = vmatprep.subr.mxu0 0.0
    %407 = vmatpush1.msra.mxu0 0.0
    %408 = vmatprep.subr.mxu0 0.0
    %409 = vmatpush1.msra.mxu0 0.0
    %410 = vmatprep.subr.mxu0 0.0
    %411 = vmatpush1.msra.mxu0 0.0
    %412 = vmatprep.subr.mxu0 0.0
    %413 = vmatpush1.msra.mxu0 0.0
    %414 = vmatprep.subr.mxu0 0.0
    %415 = vmatpush1.msra.mxu0 0.0
    %416 = vmatprep.subr.mxu0 0.0
    %417 = vmatpush1.msra.mxu0 0.0
    %418 = vmatprep.subr.mxu0 0.0
    %419 = vmatpush1.msra.mxu0 0.0
    %420 = vmatprep.subr.mxu0 0.0
    %421 = vmatpush1.msra.mxu0 0.0
    %422 = vmatprep.subr.mxu0 0.0
    %423 = vmatpush1.msra.mxu0 0.0
    %424 = vmatprep.subr.mxu0 0.0
    %425 = vmatpush1.msra.mxu0 0.0
    %426 = vmatprep.subr.mxu0 0.0
    %427 = vmatpush1.msra.mxu0 0.0
    %428 = vmatprep.subr.mxu0 0.0
    %429 = vmatpush1.msra.mxu0 0.0
    %430 = vmatprep.subr.mxu0 0.0
    %431 = vmatpush1.msra.mxu0 0.0
    %432 = vmatprep.subr.mxu0 0.0
    %433 = vmatpush1.msra.mxu0 0.0
    %434 = vmatprep.subr.mxu0 0.0
    %435 = vmatpush1.msra.mxu0 0.0
    %436 = vmatprep.subr.mxu0 0.0
    %437 = vmatpush1.msra.mxu0 0.0
    %438 = vmatprep.subr.mxu0 0.0
    %439 = vmatpush1.msra.mxu0 0.0
    %440 = vmatprep.subr.mxu0 0.0
    %441 = vmatpush1.msra.mxu0 0.0
    %442 = vmatprep.subr.mxu0 0.0
    %443 = vmatpush1.msra.mxu0 0.0
    %444 = vmatprep.subr.mxu0 0.0
    %445 = vmatpush1.msra.mxu0 0.0
    %446 = vmatprep.subr.mxu0 0.0
    %447 = vmatpush1.msra.mxu0 0.0
    %448 = vmatprep.subr.mxu0 0.0
    %449 = vmatpush1.msra.mxu0 0.0
    %450 = vmatprep.subr.mxu0 0.0
    %451 = vmatpush1.msra.mxu0 0.0
    %452 = vmatprep.subr.mxu0 0.0
    %453 = vmatpush1.msra.mxu0 0.0
    %454 = vmatprep.subr.mxu0 0.0
    %455 = vmatpush1.msra.mxu0 0.0
    %456 = vmatprep.subr.mxu0 0.0
    %457 = vmatpush1.msra.mxu0 0.0
    %458 = vmatprep.subr.mxu0 0.0
    %459 = vmatpush1.msra.mxu0 0.0
    %460 = vmatprep.subr.mxu0 0.0
    %461 = vmatpush1.msra.mxu0 0.0
    %462 = vmatprep.mubr.f32.mxu0 0.0
    %463 = vmatmul.mubr.f32.gmra.mrb[0].mxu0 %v396
    %v464 = vpop.f32.mrb[0].mxu0
    %v465 = vadd.f32 0.0, %v464
    %v466 = vpop.f32.mrb[0].mxu0
    %467 = vdwg.mxu0
    %v468 = vld [vmem:[#allocation2] sm:$0xff]
    %v469 = vld [vmem:[#allocation2 + $0x8] sm:$0xff]
    %v470 = vld [vmem:[#allocation2 + $0x10] sm:$0xff]
    %v471 = vld [vmem:[#allocation2 + $0x18] sm:$0xff]
    %v472 = vld [vmem:[#allocation2 + $0x20] sm:$0xff]
    %v473 = vld [vmem:[#allocation2 + $0x28] sm:$0xff]
    %v474 = vld [vmem:[#allocation2 + $0x30] sm:$0xff]
    %v475 = vld [vmem:[#allocation2 + $0x38] sm:$0xff]
    %v476 = vld [vmem:[#allocation2 + $0x40] sm:$0xff]
    %v477 = vld [vmem:[#allocation2 + $0x48] sm:$0xff]
    %v478 = vld [vmem:[#allocation2 + $0x50] sm:$0xff]
    %v479 = vld [vmem:[#allocation2 + $0x58] sm:$0xff]
    %v480 = vld [vmem:[#allocation2 + $0x60] sm:$0xff]
    %v481 = vld [vmem:[#allocation2 + $0x68] sm:$0xff]
    %v482 = vld [vmem:[#allocation2 + $0x70] sm:$0xff]
    %v483 = vld [vmem:[#allocation2 + $0x78] sm:$0xff]
    %v484 = vld [vmem:[#allocation2 + $0x80] sm:$0xff]
    %v485 = vld [vmem:[#allocation2 + $0x88] sm:$0xff]
    %v486 = vld [vmem:[#allocation2 + $0x90] sm:$0xff]
    %v487 = vld [vmem:[#allocation2 + $0x98] sm:$0xff]
    %v488 = vld [vmem:[#allocation2 + $0xa0] sm:$0xff]
    %v489 = vld [vmem:[#allocation2 + $0xa8] sm:$0xff]
    %v490 = vld [vmem:[#allocation2 + $0xb0] sm:$0xff]
    %v491 = vld [vmem:[#allocation2 + $0xb8] sm:$0xff]
    %v492 = vld [vmem:[#allocation2 + $0xc0] sm:$0xff]
    %v493 = vld [vmem:[#allocation2 + $0xc8] sm:$0xff]
    %v494 = vld [vmem:[#allocation2 + $0xd0] sm:$0xff]
    %v495 = vld [vmem:[#allocation2 + $0xd8] sm:$0xff]
    %v496 = vld [vmem:[#allocation2 + $0xe0] sm:$0xff]
    %v497 = vld [vmem:[#allocation2 + $0xe8] sm:$0xff]
    %v498 = vld [vmem:[#allocation2 + $0xf0] sm:$0xff]
    %v499 = vld [vmem:[#allocation2 + $0xf8] sm:$0xff]
    %v500 = vld [vmem:[%s5] sm:$0x1]
    %v502 = vlaneseq
    %v503 = vshrl.u32 %v502, 7
    %v504 = vsub.s32 0, %v503
    %v505 = vrot.slane %v500, %v504
    %507 = vmatprep.subr.mxu0 0.0
    %508 = vmatpush1.msra.mxu0 %v468
    %509 = vmatprep.subr.mxu0 0.0
    %510 = vmatpush1.msra.mxu0 %v469
    %511 = vmatprep.subr.mxu0 0.0
    %512 = vmatpush1.msra.mxu0 %v470
    %513 = vmatprep.subr.mxu0 0.0
    %514 = vmatpush1.msra.mxu0 %v471
    %515 = vmatprep.subr.mxu0 0.0
    %516 = vmatpush1.msra.mxu0 %v472
    %517 = vmatprep.subr.mxu0 0.0
    %518 = vmatpush1.msra.mxu0 %v473
    %519 = vmatprep.subr.mxu0 0.0
    %520 = vmatpush1.msra.mxu0 %v474
    %521 = vmatprep.subr.mxu0 0.0
    %522 = vmatpush1.msra.mxu0 %v475
    %523 = vmatprep.subr.mxu0 0.0
    %524 = vmatpush1.msra.mxu0 %v476
    %525 = vmatprep.subr.mxu0 0.0
    %526 = vmatpush1.msra.mxu0 %v477
    %527 = vmatprep.subr.mxu0 0.0
    %528 = vmatpush1.msra.mxu0 %v478
    %529 = vmatprep.subr.mxu0 0.0
    %530 = vmatpush1.msra.mxu0 %v479
    %531 = vmatprep.subr.mxu0 0.0
    %532 = vmatpush1.msra.mxu0 %v480
    %533 = vmatprep.subr.mxu0 0.0
    %534 = vmatpush1.msra.mxu0 %v481
    %535 = vmatprep.subr.mxu0 0.0
    %536 = vmatpush1.msra.mxu0 %v482
    %537 = vmatprep.subr.mxu0 0.0
    %538 = vmatpush1.msra.mxu0 %v483
    %539 = vmatprep.subr.mxu0 0.0
    %540 = vmatpush1.msra.mxu0 %v484
    %541 = vmatprep.subr.mxu0 0.0
    %542 = vmatpush1.msra.mxu0 %v485
    %543 = vmatprep.subr.mxu0 0.0
    %544 = vmatpush1.msra.mxu0 %v486
    %545 = vmatprep.subr.mxu0 0.0
    %546 = vmatpush1.msra.mxu0 %v487
    %547 = vmatprep.subr.mxu0 0.0
    %548 = vmatpush1.msra.mxu0 %v488
    %549 = vmatprep.subr.mxu0 0.0
    %550 = vmatpush1.msra.mxu0 %v489
    %551 = vmatprep.subr.mxu0 0.0
    %552 = vmatpush1.msra.mxu0 %v490
    %553 = vmatprep.subr.mxu0 0.0
    %554 = vmatpush1.msra.mxu0 %v491
    %555 = vmatprep.subr.mxu0 0.0
    %556 = vmatpush1.msra.mxu0 %v492
    %557 = vmatprep.subr.mxu0 0.0
    %558 = vmatpush1.msra.mxu0 %v493
    %559 = vmatprep.subr.mxu0 0.0
    %560 = vmatpush1.msra.mxu0 %v494
    %561 = vmatprep.subr.mxu0 0.0
    %562 = vmatpush1.msra.mxu0 %v495
    %563 = vmatprep.subr.mxu0 0.0
    %564 = vmatpush1.msra.mxu0 %v496
    %565 = vmatprep.subr.mxu0 0.0
    %566 = vmatpush1.msra.mxu0 %v497
    %567 = vmatprep.subr.mxu0 0.0
    %568 = vmatpush1.msra.mxu0 %v498
    %569 = vmatprep.subr.mxu0 0.0
    %570 = vmatpush1.msra.mxu0 %v499
    %571 = vmatprep.mubr.f32.mxu0 %v465
    %572 = vmatmul.mubr.f32.gmra.mrb[0].mxu0 %v311
    %v573 = vpop.f32.mrb[0].mxu0
    %v574 = vadd.f32 %v505, %v573
    %v575 = vpop.f32.mrb[0].mxu0
    %576 = vdwg.mxu0
    %v577 = vtanh.pop %v574
    %578 = vst [vmem:[#allocation5] sm:$0xff] %v577
    // Predicated region
    $region30: #{actor_episode_features.1} parent=1 // pred_check
      _
    $region31: #{actor_episode_features.1} parent=1 // pred_check_branch
      %580 = sbr.rel (0) target = $region33
    $region32: #{actor_episode_features.1} parent=1 // pred_region
      %s582 = ssub.s32 128, 128
      %583 = vsyncadd [#allocation4], %s582
      %s585 = sshll.u32 [#allocation5], 4
      %s586 = int_to_ptr.vmem [resolvable:$true] %s585
      %588 = dma.vmem_to_hbm [thread:$0]  %s586, 128, %s6, [#allocation4]
    $region33: #{actor_episode_features.1} parent=1 // pred_fallthru
      _
    // Predicated region
    $region34: #{actor_episode_features.1} parent=1 // pred_check
      _
    $region35: #{actor_episode_features.1} parent=1 // pred_check_branch
      %590 = sbr.rel (0) target = $region37
    $region36: #{actor_episode_features.1} parent=1 // pred_region
      %591 = dma.done [#allocation4], 128
    $region37: #{actor_episode_features.1} parent=1 // pred_fallthru
      _
    %592 = vsyncpa [#allocation3], 1
    %593 = vsyncpa [#allocation4], 1

</llo_original>
